<compile_context>
chip_gen: v7x
topology: tpu7x:2x2x1
jax: 0.10.0
libtpu: 0.0.40
codegen_flags: <defaults>
</compile_context>

<pallas_src>
import functools

import jax
import jax.numpy as jnp
from jax.experimental import pallas as pl
from jax.experimental.pallas import tpu as pltpu

LANE = 128     # TPU lane width
H1 = 16        # hidden1 width
H2 = 8         # hidden2 width


def _round_up(n, m):
    return ((n + m - 1) // m) * m


def _param_offsets(feature_size):
    """Row offsets of each packed parameter inside the (rows, 128) slab (all 8-aligned)."""
    f_pad = _round_up(feature_size, 8)
    r_w1 = 0
    r_b1 = f_pad
    r_w2 = r_b1 + 8
    r_b2 = r_w2 + LANE
    r_w3 = r_b2 + 8
    r_b3 = r_w3 + LANE
    n_rows = r_b3 + 8          # multiple of 8
    return f_pad, r_w1, r_b1, r_w2, r_b2, r_w3, r_b3, n_rows


def pack_params(params, feature_size, num_actions):
    """Pack (w1,b1,w2,b2,w3,b3) into one zero-padded bf16 slab of shape (rows, 128)."""
    w1, b1, w2, b2, w3, b3 = params
    _, r_w1, r_b1, r_w2, r_b2, r_w3, r_b3, n_rows = _param_offsets(feature_size)
    slab = jnp.zeros((n_rows, LANE), jnp.float32)
    slab = slab.at[r_w1:r_w1 + feature_size, :H1].set(w1)
    slab = slab.at[r_b1, :H1].set(jnp.reshape(b1, (-1,)))
    slab = slab.at[r_w2:r_w2 + H1, :H2].set(w2)
    slab = slab.at[r_b2, :H2].set(jnp.reshape(b2, (-1,)))
    slab = slab.at[r_w3:r_w3 + H2, :num_actions].set(w3)
    slab = slab.at[r_b3, :num_actions].set(jnp.reshape(b3, (-1,)))
    return slab.astype(jnp.bfloat16)


def _make_dqn_kernel(feature_size, out_pad):
    _, r_w1, r_b1, r_w2, r_b2, r_w3, r_b3, _ = _param_offsets(feature_size)

    def kernel(x_ref, p_ref, o_ref):
        f32, bf16 = jnp.float32, jnp.bfloat16
        # x streamed from HBM as f32; cast to bf16 in-register for the MXU
        # (avoids a separate wrapper-side pad/cast pass over HBM).
        x = x_ref[...].astype(bf16)                                   # (TB, F)
        # layer 1: bf16 MXU dot, f32 accumulate; bias + ReLU in f32 (v5e-safe)
        h = jnp.dot(x, p_ref[r_w1:r_w1 + feature_size, :],
                    preferred_element_type=f32)
        h = jnp.maximum(h + p_ref[r_b1:r_b1 + 1, :].astype(f32), 0.0)
        # layer 2 (padded lanes of h are exactly zero -> no contamination)
        h = jnp.dot(h.astype(bf16), p_ref[r_w2:r_w2 + LANE, :],
                    preferred_element_type=f32)
        h = jnp.maximum(h + p_ref[r_b2:r_b2 + 1, :].astype(f32), 0.0)
        # output layer (no activation); keep only the first out_pad lanes so the
        # HBM output stream is narrow (lanes >= num_actions are exactly 0).
        out = jnp.dot(h.astype(bf16), p_ref[r_w3:r_w3 + LANE, :],
                      preferred_element_type=f32)
        out = out + p_ref[r_b3:r_b3 + 1, :].astype(f32)
        o_ref[...] = out[:, :out_pad].astype(o_ref.dtype)

    return kernel


@functools.partial(jax.jit, static_argnames=("num_actions", "block_b"))
def dqn_forward(x, params, num_actions, block_b=None):
    """y = out(relu(hidden2(relu(hidden1(x))))) via a single fused Pallas kernel."""
    B, F = x.shape
    out_pad = _round_up(num_actions, 8)
    _, _, _, _, _, _, _, n_rows = _param_offsets(F)

    if block_b is None:
        if B <= 1024:
            tb = max(8, _round_up(B, 8))                 # single block for small B
        else:
            # big tiles amortize per-step overhead, but keep >= 2 blocks so the
            # "parallel" batch axis can shard across v7x's two TensorCores.
            tb = min(2048, _round_up((B + 1) // 2, 8))
    else:
        tb = _round_up(int(block_b), 8)
    tb = min(tb, _round_up(B, 8))
    n_blocks = (B + tb - 1) // tb                        # partial last block OK

    slab = pack_params(params, F, num_actions)

    out = pl.pallas_call(
        _make_dqn_kernel(F, out_pad),
        # narrow, f32 output: only out_pad lanes (f32 kept for Q-value argmax stability)
        out_shape=jax.ShapeDtypeStruct((B, out_pad), jnp.float32),
        grid=(n_blocks,),
        in_specs=[
            # x: one (tb, F) block per grid step -> pipelined / double-buffered;
            # last dim == full array last dim, so no feature padding needed.
            pl.BlockSpec((tb, F), lambda i: (i, 0)),
            # packed params: constant index_map -> loaded once, resident in VMEM.
            # (pl.Buffered(1) would shave ~78 KiB VMEM; skipped as low-priority.)
            pl.BlockSpec((n_rows, LANE), lambda i: (0, 0)),
        ],
        # narrow output block (last dim == full array last dim)
        out_specs=pl.BlockSpec((tb, out_pad), lambda i: (i, 0)),
        compiler_params=pltpu.CompilerParams(
            dimension_semantics=("parallel",),           # shards batch across TCs on v7x
            vmem_limit_bytes=32 * 1024 * 1024,           # safe on v5e/v6e/v7x for these tiles
        ),
        cost_estimate=pl.CostEstimate(
            flops=2 * B * (F * H1 + H1 * H2 + H2 * num_actions),
            transcendentals=0,
            bytes_accessed=B * F * 4 + B * out_pad * 4 + int(slab.size) * 2,
        ),
    )(x, slab)
    return out[:, :num_actions]


def init_linear(key, fan_in, fan_out):
    # PyTorch nn.Linear default init: U(-1/sqrt(fan_in), 1/sqrt(fan_in)) for W and b.
    kw, kb = jax.random.split(key)
    bound = 1.0 / jnp.sqrt(float(fan_in))
    # stored [in, out] so forward is x @ W (== PyTorch's x @ W.T with W stored [out, in])
    w = jax.random.uniform(kw, (fan_in, fan_out), jnp.float32, -bound, bound)
    b = jax.random.uniform(kb, (1, fan_out), jnp.float32, -bound, bound)
    return w, b


def reference_forward_f32(x, params):
    w1, b1, w2, b2, w3, b3 = params
    h1 = jnp.maximum(x @ w1 + b1, 0.0)
    h2 = jnp.maximum(h1 @ w2 + b2, 0.0)
    return h2 @ w3 + b3


def reference_forward_like_kernel(x, params):
    """Pure-JAX reference using the same bf16-inputs / f32-accumulate recipe as the kernel."""
    w1, b1, w2, b2, w3, b3 = params
    bf, f32 = jnp.bfloat16, jnp.float32
    h = jnp.dot(x.astype(bf), w1.astype(bf), preferred_element_type=f32)
    h = jnp.maximum(h + b1.astype(bf).astype(f32), 0.0)
    h = jnp.dot(h.astype(bf), w2.astype(bf), preferred_element_type=f32)
    h = jnp.maximum(h + b2.astype(bf).astype(f32), 0.0)
    out = jnp.dot(h.astype(bf), w3.astype(bf), preferred_element_type=f32)
    return out + b3.astype(bf).astype(f32)


if __name__ == "__main__":
    num_actions = 4
    feature_size = 32
    batch = 8

    key = jax.random.PRNGKey(0)
    kx, k1, k2, k3, kx2 = jax.random.split(key, 5)

    x = jax.random.normal(kx, (batch, feature_size), jnp.float32)
    w1, b1 = init_linear(k1, feature_size, H1)
    w2, b2 = init_linear(k2, H1, H2)
    w3, b3 = init_linear(k3, H2, num_actions)
    params = (w1, b1, w2, b2, w3, b3)

    out = jax.block_until_ready(dqn_forward(x, params, num_actions))
    assert out.shape == (batch, num_actions)
    ref = reference_forward_like_kernel(x, params)
    assert jnp.allclose(out, ref, atol=1e-3, rtol=1e-3), "mismatch vs bf16-matched reference"
    ref32 = reference_forward_f32(x, params)
    assert jnp.allclose(out, ref32, atol=5e-2, rtol=5e-2), "mismatch vs f32 reference"

    # multi-block grid (grid=(3,)) with a PARTIAL last block (600 = 2*256 + 88):
    # exercises Pallas' masked boundary handling with no wrapper-side padding pass.
    x2 = jax.random.normal(kx2, (600, feature_size), jnp.float32)
    out2 = jax.block_until_ready(dqn_forward(x2, params, num_actions, block_b=256))
    assert out2.shape == (600, num_actions)
    ref2 = reference_forward_like_kernel(x2, params)
    assert jnp.allclose(out2, ref2, atol=1e-3, rtol=1e-3), "mismatch on multi-tile run"

    print("KERNEL_OK")
</pallas_src>

<mosaic_0001>
module attributes {stable_mosaic.version = 11 : i64} {
  func.func @kernel(%arg0: i32, %arg1: memref<8x32xf32, #tpu.memory_space<vmem>>, %arg2: memref<312x128xbf16, #tpu.memory_space<vmem>>, %arg3: memref<8x8xf32, #tpu.memory_space<vmem>>) attributes {dimension_semantics = [#tpu.dimension_semantics<parallel>], iteration_bounds = array<i64: 1>, scalar_prefetch = 0 : i64, scratch_operands = 0 : i64, tpu.core_type = #tpu.core_type<tc>, window_params = [{transform_indices = @transform_0, window_bounds = array<i64: 8, 32>}, {pipeline_mode = #tpu.pipeline_mode<synchronous>, transform_indices = @transform_1, window_bounds = array<i64: 312, 128>}, {transform_indices = @transform_2, window_bounds = array<i64: 8, 8>}]} {
    %c0 = arith.constant 0 : index
    %c0_0 = arith.constant 0 : index
    %0 = vector.load %arg1[%c0, %c0_0] : memref<8x32xf32, #tpu.memory_space<vmem>>, vector<8x32xf32>
    %1 = arith.truncf %0 : vector<8x32xf32> to vector<8x32xbf16>
    %c0_1 = arith.constant 0 : index
    %c0_2 = arith.constant 0 : index
    %2 = vector.load %arg2[%c0_1, %c0_2] : memref<312x128xbf16, #tpu.memory_space<vmem>>, vector<32x128xbf16>
    %cst = arith.constant dense<0.000000e+00> : vector<8x128xf32>
    %3 = tpu.matmul %1, %2, %cst {dimension_numbers = #tpu.dot_dimension_numbers<[1], [0], [0], [1], [0, 0, 1, 1], [], []>} : vector<8x32xbf16>, vector<32x128xbf16>, vector<8x128xf32> -> vector<8x128xf32>
    %c32 = arith.constant 32 : index
    %c0_3 = arith.constant 0 : index
    %4 = vector.load %arg2[%c32, %c0_3] : memref<312x128xbf16, #tpu.memory_space<vmem>>, vector<1x128xbf16>
    %5 = arith.extf %4 : vector<1x128xbf16> to vector<1x128xf32>
    %6 = vector.broadcast %5 : vector<1x128xf32> to vector<8x128xf32>
    %7 = arith.addf %3, %6 : vector<8x128xf32>
    %cst_4 = arith.constant 0.000000e+00 : f32
    %8 = vector.broadcast %cst_4 : f32 to vector<8x128xf32>
    %9 = arith.maximumf %7, %8 : vector<8x128xf32>
    %10 = arith.truncf %9 : vector<8x128xf32> to vector<8x128xbf16>
    %c40 = arith.constant 40 : index
    %c0_5 = arith.constant 0 : index
    %11 = vector.load %arg2[%c40, %c0_5] : memref<312x128xbf16, #tpu.memory_space<vmem>>, vector<128x128xbf16>
    %cst_6 = arith.constant dense<0.000000e+00> : vector<8x128xf32>
    %12 = tpu.matmul %10, %11, %cst_6 {dimension_numbers = #tpu.dot_dimension_numbers<[1], [0], [0], [1], [0, 0, 1, 1], [], []>} : vector<8x128xbf16>, vector<128x128xbf16>, vector<8x128xf32> -> vector<8x128xf32>
    %c168 = arith.constant 168 : index
    %c0_7 = arith.constant 0 : index
    %13 = vector.load %arg2[%c168, %c0_7] : memref<312x128xbf16, #tpu.memory_space<vmem>>, vector<1x128xbf16>
    %14 = arith.extf %13 : vector<1x128xbf16> to vector<1x128xf32>
    %15 = vector.broadcast %14 : vector<1x128xf32> to vector<8x128xf32>
    %16 = arith.addf %12, %15 : vector<8x128xf32>
    %cst_8 = arith.constant 0.000000e+00 : f32
    %17 = vector.broadcast %cst_8 : f32 to vector<8x128xf32>
    %18 = arith.maximumf %16, %17 : vector<8x128xf32>
    %19 = arith.truncf %18 : vector<8x128xf32> to vector<8x128xbf16>
    %c176 = arith.constant 176 : index
    %c0_9 = arith.constant 0 : index
    %20 = vector.load %arg2[%c176, %c0_9] : memref<312x128xbf16, #tpu.memory_space<vmem>>, vector<128x128xbf16>
    %cst_10 = arith.constant dense<0.000000e+00> : vector<8x128xf32>
    %21 = tpu.matmul %19, %20, %cst_10 {dimension_numbers = #tpu.dot_dimension_numbers<[1], [0], [0], [1], [0, 0, 1, 1], [], []>} : vector<8x128xbf16>, vector<128x128xbf16>, vector<8x128xf32> -> vector<8x128xf32>
    %c304 = arith.constant 304 : index
    %c0_11 = arith.constant 0 : index
    %22 = vector.load %arg2[%c304, %c0_11] : memref<312x128xbf16, #tpu.memory_space<vmem>>, vector<1x128xbf16>
    %23 = arith.extf %22 : vector<1x128xbf16> to vector<1x128xf32>
    %24 = vector.broadcast %23 : vector<1x128xf32> to vector<8x128xf32>
    %25 = arith.addf %21, %24 : vector<8x128xf32>
    %26 = vector.extract_strided_slice %25 {offsets = [0, 0], sizes = [8, 8], strides = [1, 1]} : vector<8x128xf32> to vector<8x8xf32>
    %c0_12 = arith.constant 0 : index
    %c0_13 = arith.constant 0 : index
    %27 = vector.load %arg3[%c0_12, %c0_13] : memref<8x8xf32, #tpu.memory_space<vmem>>, vector<8x8xf32>
    tpu.vector_store %arg3[%c0_12, %c0_13], %26 {strides = array<i32>} : memref<8x8xf32, #tpu.memory_space<vmem>>, vector<8x8xf32>,
    return
  }
  func.func @transform_0(%arg0: i32) -> (i32, i32) {
    %c0_i32 = arith.constant 0 : i32
    %c0_i32_0 = arith.constant 0 : i32
    return %arg0, %c0_i32 : i32, i32
  }
  func.func @transform_1(%arg0: i32) -> (i32, i32) {
    %c0_i32 = arith.constant 0 : i32
    %c0_i32_0 = arith.constant 0 : i32
    %c0_i32_1 = arith.constant 0 : i32
    return %c0_i32, %c0_i32_0 : i32, i32
  }
  func.func @transform_2(%arg0: i32) -> (i32, i32) {
    %c0_i32 = arith.constant 0 : i32
    %c0_i32_0 = arith.constant 0 : i32
    return %arg0, %c0_i32 : i32, i32
  }
}

</mosaic_0001>

<llo_original>
// kernel: dqn_forward.1
$region0: #{dqn_forward.1}
  #allocation0 [shape = 'u32[]', space=smem, size = 0x4, offset = 0x4, fixed_abs, tag = 'smem constant byte address 0x4 - core index']
  #allocation1 [shape = 'u32[144,128]{1,0:T(1,128)}', space=vmem, size = 0x12000, scoped, tag = 'internal scratch']
  %s0 = inlined_call_operand.vmem [shape: f32[8,32], index: 0, kind: input, shape index: {}]
  %s1 = inlined_call_operand.vmem [shape: bf16[312,128], index: 1, kind: input, shape index: {}]
  %s2 = inlined_call_operand.vmem [shape: f32[8,8], index: 2, kind: output, shape index: {}]
  %s3 = sld [smem:[#allocation0]]
  $region18: #{dqn_forward.1} parent=0
    _
  %s5 = ssub.s32 1, %s3
  %s6 = scalar_select 0, %s5, %s3
  // Predicated region
  $region2: #{dqn_forward.1} parent=0 // pred_check
    _
  $region3: #{dqn_forward.1} parent=0 // pred_check_branch
    %8 = sbr.rel (0) target = $region5
  $region4: #{dqn_forward.1} parent=0 // pred_region
    _
  $region5: #{dqn_forward.1} parent=0 // pred_fallthru
    _
  // Predicated region
  $region6: #{dqn_forward.1} parent=0 // pred_check
    _
  $region7: #{dqn_forward.1} parent=0 // pred_check_branch
    %10 = sbr.rel (0) target = $region9
  $region8: #{dqn_forward.1} parent=0 // pred_region
    _
  $region9: #{dqn_forward.1} parent=0 // pred_fallthru
    _
  %v12 = vld [vmem:[%s0] sm:$0xff]
  %v13 = vpack.c.bf16 %v12, %v12
  %v14 = vld [vmem:[%s1] sm:$0xf]
  %v15 = vld [vmem:[%s1 + $0x4] sm:$0xf]
  %v16 = vld [vmem:[%s1 + $0x8] sm:$0xf]
  %v17 = vld [vmem:[%s1 + $0xc] sm:$0xf]
  %v18 = vld [vmem:[%s1 + $0x10] sm:$0x1]
  %v19 = vunpack.c.l.bf16 %v18
  %v20 = vlaneseq
  %v21 = vshrl.u32 %v20, 7
  %v22 = vsub.s32 0, %v21
  %v23 = vrot.slane %v19, %v22
  %v28 = vunpack.c.l.b16 %v14
  %v29 = vunpack.c.l.b16 %v15
  %v30 = vunpack.c.l.b16 %v16
  %v31 = vunpack.c.l.b16 %v17
  %v32 = vpack.c.b16 %v29, %v28
  %v33 = vpack.c.b16 %v31, %v30
  %vm36 = vcmask 261120
  %v38 = vsel %vm36, %v13, 0
  %40 = vmatprep.subr.bf16.mxu0 0
  %41 = vmatpush1.bf16.msra.mxu0 %v32
  %42 = vmatprep.subr.bf16.mxu0 0
  %43 = vmatpush1.bf16.msra.mxu0 %v33
  %44 = vmatprep.subr.bf16.mxu0 0
  %45 = vmatpush1.bf16.msra.mxu0 0
  %46 = vmatprep.subr.bf16.mxu0 0
  %47 = vmatpush1.bf16.msra.mxu0 0
  %48 = vmatprep.subr.bf16.mxu0 0
  %49 = vmatpush1.bf16.msra.mxu0 0
  %50 = vmatprep.subr.bf16.mxu0 0
  %51 = vmatpush1.bf16.msra.mxu0 0
  %52 = vmatprep.subr.bf16.mxu0 0
  %53 = vmatpush1.bf16.msra.mxu0 0
  %54 = vmatprep.subr.bf16.mxu0 0
  %55 = vmatpush1.bf16.msra.mxu0 0
  %56 = vmatprep.subr.bf16.mxu0 0
  %57 = vmatpush1.bf16.msra.mxu0 0
  %58 = vmatprep.subr.bf16.mxu0 0
  %59 = vmatpush1.bf16.msra.mxu0 0
  %60 = vmatprep.subr.bf16.mxu0 0
  %61 = vmatpush1.bf16.msra.mxu0 0
  %62 = vmatprep.subr.bf16.mxu0 0
  %63 = vmatpush1.bf16.msra.mxu0 0
  %64 = vmatprep.subr.bf16.mxu0 0
  %65 = vmatpush1.bf16.msra.mxu0 0
  %66 = vmatprep.subr.bf16.mxu0 0
  %67 = vmatpush1.bf16.msra.mxu0 0
  %68 = vmatprep.subr.bf16.mxu0 0
  %69 = vmatpush1.bf16.msra.mxu0 0
  %70 = vmatprep.subr.bf16.mxu0 0
  %71 = vmatpush1.bf16.msra.mxu0 0
  %72 = vmatprep.mubr.bf16.mxu0 0
  %73 = vmatmul.mubr.bf16.gmra.mrb[0].mxu0 %v38
  %v74 = vpop.f32.mrb[0].mxu0
  %v75 = vadd.f32 %v23, %v74
  %v76 = vpop.f32.mrb[0].mxu0
  %v77 = vpop.f32.mrb[0].mxu0
  %v78 = vpop.f32.mrb[0].mxu0
  %79 = vdwg.mxu0
  %v80 = vmax.f32 %v75, 0.0
  %v81 = vpack.c.bf16 %v80, %v80
  %v82 = vld [vmem:[%s1 + $0x14] sm:$0xf]
  %v83 = vld [vmem:[%s1 + $0x18] sm:$0xf]
  %v84 = vld [vmem:[%s1 + $0x1c] sm:$0xf]
  %v85 = vld [vmem:[%s1 + $0x20] sm:$0xf]
  %v86 = vld [vmem:[%s1 + $0x24] sm:$0xf]
  %v87 = vld [vmem:[%s1 + $0x28] sm:$0xf]
  %v88 = vld [vmem:[%s1 + $0x2c] sm:$0xf]
  %v89 = vld [vmem:[%s1 + $0x30] sm:$0xf]
  %v90 = vld [vmem:[%s1 + $0x34] sm:$0xf]
  %v91 = vld [vmem:[%s1 + $0x38] sm:$0xf]
  %v92 = vld [vmem:[%s1 + $0x3c] sm:$0xf]
  %v93 = vld [vmem:[%s1 + $0x40] sm:$0xf]
  %v94 = vld [vmem:[%s1 + $0x44] sm:$0xf]
  %v95 = vld [vmem:[%s1 + $0x48] sm:$0xf]
  %v96 = vld [vmem:[%s1 + $0x4c] sm:$0xf]
  %v97 = vld [vmem:[%s1 + $0x50] sm:$0xf]
  %v98 = vld [vmem:[%s1 + $0x54] sm:$0x1]
  %v99 = vunpack.c.l.bf16 %v98
  %v100 = vlaneseq
  %v101 = vshrl.u32 %v100, 7
  %v102 = vsub.s32 0, %v101
  %v103 = vrot.slane %v99, %v102
  %v120 = vunpack.c.l.b16 %v82
  %v121 = vunpack.c.l.b16 %v83
  %v122 = vunpack.c.l.b16 %v84
  %v123 = vunpack.c.l.b16 %v85
  %v124 = vunpack.c.l.b16 %v86
  %v125 = vunpack.c.l.b16 %v87
  %v126 = vunpack.c.l.b16 %v88
  %v127 = vunpack.c.l.b16 %v89
  %v128 = vunpack.c.l.b16 %v90
  %v129 = vunpack.c.l.b16 %v91
  %v130 = vunpack.c.l.b16 %v92
  %v131 = vunpack.c.l.b16 %v93
  %v132 = vunpack.c.l.b16 %v94
  %v133 = vunpack.c.l.b16 %v95
  %v134 = vunpack.c.l.b16 %v96
  %v135 = vunpack.c.l.b16 %v97
  %v136 = vpack.c.b16 %v121, %v120
  %v137 = vpack.c.b16 %v123, %v122
  %v138 = vpack.c.b16 %v125, %v124
  %v139 = vpack.c.b16 %v127, %v126
  %v140 = vpack.c.b16 %v129, %v128
  %v141 = vpack.c.b16 %v131, %v130
  %v142 = vpack.c.b16 %v133, %v132
  %v143 = vpack.c.b16 %v135, %v134
  %152 = vmatprep.subr.bf16.mxu0 0
  %153 = vmatpush1.bf16.msra.mxu0 %v136
  %154 = vmatprep.subr.bf16.mxu0 0
  %155 = vmatpush1.bf16.msra.mxu0 %v137
  %156 = vmatprep.subr.bf16.mxu0 0
  %157 = vmatpush1.bf16.msra.mxu0 %v138
  %158 = vmatprep.subr.bf16.mxu0 0
  %159 = vmatpush1.bf16.msra.mxu0 %v139
  %160 = vmatprep.subr.bf16.mxu0 0
  %161 = vmatpush1.bf16.msra.mxu0 %v140
  %162 = vmatprep.subr.bf16.mxu0 0
  %163 = vmatpush1.bf16.msra.mxu0 %v141
  %164 = vmatprep.subr.bf16.mxu0 0
  %165 = vmatpush1.bf16.msra.mxu0 %v142
  %166 = vmatprep.subr.bf16.mxu0 0
  %167 = vmatpush1.bf16.msra.mxu0 %v143
  %168 = vmatprep.subr.bf16.mxu0 0
  %169 = vmatpush1.bf16.msra.mxu0 0
  %170 = vmatprep.subr.bf16.mxu0 0
  %171 = vmatpush1.bf16.msra.mxu0 0
  %172 = vmatprep.subr.bf16.mxu0 0
  %173 = vmatpush1.bf16.msra.mxu0 0
  %174 = vmatprep.subr.bf16.mxu0 0
  %175 = vmatpush1.bf16.msra.mxu0 0
  %176 = vmatprep.subr.bf16.mxu0 0
  %177 = vmatpush1.bf16.msra.mxu0 0
  %178 = vmatprep.subr.bf16.mxu0 0
  %179 = vmatpush1.bf16.msra.mxu0 0
  %180 = vmatprep.subr.bf16.mxu0 0
  %181 = vmatpush1.bf16.msra.mxu0 0
  %182 = vmatprep.subr.bf16.mxu0 0
  %183 = vmatpush1.bf16.msra.mxu0 0
  %184 = vmatprep.mubr.bf16.mxu0 0
  %185 = vmatmul.mubr.bf16.gmra.mrb[0].mxu0 %v81
  %v186 = vpop.f32.mrb[0].mxu0
  %v187 = vadd.f32 %v103, %v186
  %v188 = vpop.f32.mrb[0].mxu0
  %v189 = vpop.f32.mrb[0].mxu0
  %v190 = vpop.f32.mrb[0].mxu0
  %191 = vdwg.mxu0
  %v192 = vmax.f32 %v187, 0.0
  %v193 = vpack.c.bf16 %v192, %v192
  %v194 = vld [vmem:[%s1 + $0x58] sm:$0xf]
  %v195 = vld [vmem:[%s1 + $0x5c] sm:$0xf]
  %v196 = vld [vmem:[%s1 + $0x60] sm:$0xf]
  %v197 = vld [vmem:[%s1 + $0x64] sm:$0xf]
  %v198 = vld [vmem:[%s1 + $0x68] sm:$0xf]
  %v199 = vld [vmem:[%s1 + $0x6c] sm:$0xf]
  %v200 = vld [vmem:[%s1 + $0x70] sm:$0xf]
  %v201 = vld [vmem:[%s1 + $0x74] sm:$0xf]
  %v202 = vld [vmem:[%s1 + $0x78] sm:$0xf]
  %v203 = vld [vmem:[%s1 + $0x7c] sm:$0xf]
  %v204 = vld [vmem:[%s1 + $0x80] sm:$0xf]
  %v205 = vld [vmem:[%s1 + $0x84] sm:$0xf]
  %v206 = vld [vmem:[%s1 + $0x88] sm:$0xf]
  %v207 = vld [vmem:[%s1 + $0x8c] sm:$0xf]
  %v208 = vld [vmem:[%s1 + $0x90] sm:$0xf]
  %v209 = vld [vmem:[%s1 + $0x94] sm:$0xf]
  %v210 = vld [vmem:[%s1 + $0x98] sm:$0x1]
  %v211 = vunpack.c.l.bf16 %v210
  %v212 = vlaneseq
  %v213 = vshrl.u32 %v212, 7
  %v214 = vsub.s32 0, %v213
  %v215 = vrot.slane %v211, %v214
  %v232 = vunpack.c.l.b16 %v194
  %v233 = vunpack.c.l.b16 %v195
  %v234 = vunpack.c.l.b16 %v196
  %v235 = vunpack.c.l.b16 %v197
  %v236 = vunpack.c.l.b16 %v198
  %v237 = vunpack.c.l.b16 %v199
  %v238 = vunpack.c.l.b16 %v200
  %v239 = vunpack.c.l.b16 %v201
  %v240 = vunpack.c.l.b16 %v202
  %v241 = vunpack.c.l.b16 %v203
  %v242 = vunpack.c.l.b16 %v204
  %v243 = vunpack.c.l.b16 %v205
  %v244 = vunpack.c.l.b16 %v206
  %v245 = vunpack.c.l.b16 %v207
  %v246 = vunpack.c.l.b16 %v208
  %v247 = vunpack.c.l.b16 %v209
  %v248 = vpack.c.b16 %v233, %v232
  %v249 = vpack.c.b16 %v235, %v234
  %v250 = vpack.c.b16 %v237, %v236
  %v251 = vpack.c.b16 %v239, %v238
  %v252 = vpack.c.b16 %v241, %v240
  %v253 = vpack.c.b16 %v243, %v242
  %v254 = vpack.c.b16 %v245, %v244
  %v255 = vpack.c.b16 %v247, %v246
  %264 = vmatprep.subr.bf16.mxu0 0
  %265 = vmatpush1.bf16.msra.mxu0 %v248
  %266 = vmatprep.subr.bf16.mxu0 0
  %267 = vmatpush1.bf16.msra.mxu0 %v249
  %268 = vmatprep.subr.bf16.mxu0 0
  %269 = vmatpush1.bf16.msra.mxu0 %v250
  %270 = vmatprep.subr.bf16.mxu0 0
  %271 = vmatpush1.bf16.msra.mxu0 %v251
  %272 = vmatprep.subr.bf16.mxu0 0
  %273 = vmatpush1.bf16.msra.mxu0 %v252
  %274 = vmatprep.subr.bf16.mxu0 0
  %275 = vmatpush1.bf16.msra.mxu0 %v253
  %276 = vmatprep.subr.bf16.mxu0 0
  %277 = vmatpush1.bf16.msra.mxu0 %v254
  %278 = vmatprep.subr.bf16.mxu0 0
  %279 = vmatpush1.bf16.msra.mxu0 %v255
  %280 = vmatprep.subr.bf16.mxu0 0
  %281 = vmatpush1.bf16.msra.mxu0 0
  %282 = vmatprep.subr.bf16.mxu0 0
  %283 = vmatpush1.bf16.msra.mxu0 0
  %284 = vmatprep.subr.bf16.mxu0 0
  %285 = vmatpush1.bf16.msra.mxu0 0
  %286 = vmatprep.subr.bf16.mxu0 0
  %287 = vmatpush1.bf16.msra.mxu0 0
  %288 = vmatprep.subr.bf16.mxu0 0
  %289 = vmatpush1.bf16.msra.mxu0 0
  %290 = vmatprep.subr.bf16.mxu0 0
  %291 = vmatpush1.bf16.msra.mxu0 0
  %292 = vmatprep.subr.bf16.mxu0 0
  %293 = vmatpush1.bf16.msra.mxu0 0
  %294 = vmatprep.subr.bf16.mxu0 0
  %295 = vmatpush1.bf16.msra.mxu0 0
  %296 = vmatprep.mubr.bf16.mxu0 0
  %297 = vmatmul.mubr.bf16.gmra.mrb[0].mxu0 %v193
  %v298 = vpop.f32.mrb[0].mxu0
  %v299 = vadd.f32 %v215, %v298
  %v300 = vpop.f32.mrb[0].mxu0
  %v301 = vpop.f32.mrb[0].mxu0
  %v302 = vpop.f32.mrb[0].mxu0
  %303 = vdwg.mxu0
  %vm304 = vcmask 64512
  %305 = vst.msk [vmem:[%s2] sm:$0xff] %vm304, %v299
  // Predicated region
  $region10: #{dqn_forward.1} parent=0 // pred_check
    _
  $region11: #{dqn_forward.1} parent=0 // pred_check_branch
    %307 = sbr.rel (0) target = $region13
  $region12: #{dqn_forward.1} parent=0 // pred_region
    _
  $region13: #{dqn_forward.1} parent=0 // pred_fallthru
    _
  // Predicated region
  $region14: #{dqn_forward.1} parent=0 // pred_check
    _
  $region15: #{dqn_forward.1} parent=0 // pred_check_branch
    %309 = sbr.rel (0) target = $region17
  $region16: #{dqn_forward.1} parent=0 // pred_region
    _
  $region17: #{dqn_forward.1} parent=0 // pred_fallthru
    _

</llo_original>
